<compile_context>
chip_gen: v5e
topology: v5e:2x2
jax: 0.10.0
libtpu: 0.0.40
codegen_flags: <defaults>
</compile_context>

<pallas_src>
import jax
import jax.numpy as jnp
import numpy as np
from jax.experimental import pallas as pl
from jax.experimental.pallas import tpu as pltpu


def _round_up(n, m):
    return ((n + m - 1) // m) * m


def valuenet_kernel(x_ref, w1_ref, b1_ref, w2_ref, b2_ref, o_ref):
    # fc1 on the MXU: bf16 inputs, f32 accumulation.
    h = jnp.dot(x_ref[...], w1_ref[...], preferred_element_type=jnp.float32)
    h = jnp.maximum(h + b1_ref[...], 0.0)              # (TB, H) f32 on the VPU
    # fc2 (N == 1): VPU multiply + lane reduction — skip the MXU entirely.
    y = jnp.sum(h * w2_ref[...], axis=-1)              # (TB,)
    y = y + b2_ref[0, 0]                                # SMEM scalar bias
    # Lane-dense store: batch lives on the lane axis of the (1, 1, TB) output block.
    o_ref[...] = y.reshape(o_ref.shape).astype(o_ref.dtype)


def value_net_forward(x, w1, b1, w2, b2, *, block_b=512):
    """x: (B, state_dim) f32; w1: (state_dim, hidden); b1: (1, hidden);
    w2: (hidden, 1); b2: (1, 1).  Returns (B, 1) float32."""
    B, S = x.shape
    H = w1.shape[1]

    # Batch tile: lane-dense (multiple of 128), capped at block_b; pad B to a multiple.
    tb = min(_round_up(block_b, 128), _round_up(max(B, 1), 128))
    b_pad = _round_up(B, tb)
    grid_b = b_pad // tb

    if b_pad != B:
        x = jnp.pad(x, ((0, b_pad - B), (0, 0)))

    # bf16 for the MXU operands only; elementwise params stay f32.
    x_bf16 = x.astype(jnp.bfloat16)
    w1_bf16 = w1.astype(jnp.bfloat16)
    b1_f32 = b1.reshape(1, H).astype(jnp.float32)
    w2_row = w2.reshape(1, H).astype(jnp.float32)
    b2_f32 = b2.reshape(1, 1).astype(jnp.float32)

    out = pl.pallas_call(
        valuenet_kernel,
        out_shape=jax.ShapeDtypeStruct((grid_b, 1, tb), jnp.float32),
        grid=(grid_b,),
        in_specs=[
            # x: streamed one batch tile per grid step.
            pl.BlockSpec((tb, S), lambda i: (i, 0)),
            # Weights/biases: constant index_map -> DMA'd once, resident in VMEM.
            pl.BlockSpec((S, H), lambda i: (0, 0)),
            pl.BlockSpec((1, H), lambda i: (0, 0)),
            pl.BlockSpec((1, H), lambda i: (0, 0)),
            # b2: scalar in SMEM.
            pl.BlockSpec(memory_space=pltpu.MemorySpace.SMEM),
        ],
        out_specs=pl.BlockSpec((1, 1, tb), lambda i: (i, 0, 0)),
        compiler_params=pltpu.CompilerParams(
            dimension_semantics=("parallel",),
        ),
    )(x_bf16, w1_bf16, b1_f32, w2_row, b2_f32)

    # (grid_b, 1, tb) lane-dense slab -> (B, 1), dropping batch padding.
    return out.reshape(b_pad, 1)[:B]


def init_value_net_params(key, state_dim, hidden_dim):
    """Deterministic init mirroring nn.Linear defaults:
    U(-1/sqrt(fan_in), 1/sqrt(fan_in)) for both weights and biases."""
    k1, k2, k3, k4 = jax.random.split(key, 4)
    bound1 = 1.0 / np.sqrt(state_dim)
    bound2 = 1.0 / np.sqrt(hidden_dim)
    # Stored as (in, out) — transposed relative to PyTorch's (out, in).
    w1 = jax.random.uniform(k1, (state_dim, hidden_dim), jnp.float32, -bound1, bound1)
    b1 = jax.random.uniform(k2, (1, hidden_dim), jnp.float32, -bound1, bound1)
    w2 = jax.random.uniform(k3, (hidden_dim, 1), jnp.float32, -bound2, bound2)
    b2 = jax.random.uniform(k4, (1, 1), jnp.float32, -bound2, bound2)
    return w1, b1, w2, b2


if __name__ == "__main__":
    state_dim = 16
    hidden_dim = 256   # matches the module-level hidden_dim in the PyTorch spec
    batch = 8

    key = jax.random.PRNGKey(0)
    kx, kp = jax.random.split(key)
    x = jax.random.normal(kx, (batch, state_dim), jnp.float32)
    w1, b1, w2, b2 = init_value_net_params(kp, state_dim, hidden_dim)

    out = jax.block_until_ready(value_net_forward(x, w1, b1, w2, b2))
    assert out.shape == (batch, 1)

    # Pure-JAX reference with the same numerics as the kernel
    # (bf16 MXU inputs for fc1, f32 everywhere else).
    xb = x.astype(jnp.bfloat16).astype(jnp.float32)
    w1b = w1.astype(jnp.bfloat16).astype(jnp.float32)
    h_ref = jnp.maximum(xb @ w1b + b1, 0.0)
    ref = h_ref @ w2 + b2
    np.testing.assert_allclose(np.asarray(out), np.asarray(ref), rtol=1e-3, atol=1e-3)

    print("KERNEL_OK")
</pallas_src>

<mosaic_0001>
module attributes {stable_mosaic.version = 11 : i64} {
  func.func @valuenet_kernel(%arg0: i32, %arg1: memref<128x16xbf16, #tpu.memory_space<vmem>>, %arg2: memref<16x256xbf16, #tpu.memory_space<vmem>>, %arg3: memref<1x256xf32, #tpu.memory_space<vmem>>, %arg4: memref<1x256xf32, #tpu.memory_space<vmem>>, %arg5: memref<1x1xf32, #tpu.memory_space<smem>>, %arg6: memref<1x1x128xf32, #tpu.memory_space<vmem>>) attributes {dimension_semantics = [#tpu.dimension_semantics<parallel>], iteration_bounds = array<i64: 1>, scalar_prefetch = 0 : i64, scratch_operands = 0 : i64, tpu.core_type = #tpu.core_type<tc>, window_params = [{transform_indices = @transform_0, window_bounds = array<i64: 128, 16>}, {pipeline_mode = #tpu.pipeline_mode<synchronous>, transform_indices = @transform_1, window_bounds = array<i64: 16, 256>}, {pipeline_mode = #tpu.pipeline_mode<synchronous>, transform_indices = @transform_2, window_bounds = array<i64: 1, 256>}, {pipeline_mode = #tpu.pipeline_mode<synchronous>, transform_indices = @transform_3, window_bounds = array<i64: 1, 256>}, {transform_indices = @transform_4, window_bounds = array<i64: 1, 1>}, {transform_indices = @transform_5, window_bounds = array<i64: 1, 1, 128>}]} {
    %c0 = arith.constant 0 : index
    %c0_0 = arith.constant 0 : index
    %0 = vector.load %arg1[%c0, %c0_0] : memref<128x16xbf16, #tpu.memory_space<vmem>>, vector<128x16xbf16>
    %c0_1 = arith.constant 0 : index
    %c0_2 = arith.constant 0 : index
    %1 = vector.load %arg2[%c0_1, %c0_2] : memref<16x256xbf16, #tpu.memory_space<vmem>>, vector<16x256xbf16>
    %cst = arith.constant dense<0.000000e+00> : vector<128x256xf32>
    %2 = tpu.matmul %0, %1, %cst {dimension_numbers = #tpu.dot_dimension_numbers<[1], [0], [0], [1], [0, 0, 1, 1], [], []>} : vector<128x16xbf16>, vector<16x256xbf16>, vector<128x256xf32> -> vector<128x256xf32>
    %c0_3 = arith.constant 0 : index
    %c0_4 = arith.constant 0 : index
    %3 = vector.load %arg3[%c0_3, %c0_4] : memref<1x256xf32, #tpu.memory_space<vmem>>, vector<1x256xf32>
    %4 = vector.broadcast %3 : vector<1x256xf32> to vector<128x256xf32>
    %5 = arith.addf %2, %4 : vector<128x256xf32>
    %cst_5 = arith.constant 0.000000e+00 : f32
    %6 = vector.broadcast %cst_5 : f32 to vector<128x256xf32>
    %7 = arith.maximumf %5, %6 : vector<128x256xf32>
    %c0_6 = arith.constant 0 : index
    %c0_7 = arith.constant 0 : index
    %8 = vector.load %arg4[%c0_6, %c0_7] : memref<1x256xf32, #tpu.memory_space<vmem>>, vector<1x256xf32>
    %9 = vector.broadcast %8 : vector<1x256xf32> to vector<128x256xf32>
    %10 = arith.mulf %7, %9 : vector<128x256xf32>
    %cst_8 = arith.constant dense<0.000000e+00> : vector<128xf32>
    %11 = vector.multi_reduction <add>, %10, %cst_8 [1] : vector<128x256xf32> to vector<128xf32>
    %c0_9 = arith.constant 0 : index
    %c0_10 = arith.constant 0 : index
    %12 = memref.load %arg5[%c0_9, %c0_10] : memref<1x1xf32, #tpu.memory_space<smem>>
    %13 = vector.broadcast %12 : f32 to vector<128xf32>
    %14 = arith.addf %11, %13 : vector<128xf32>
    %15 = vector.shape_cast %14 : vector<128xf32> to vector<1x1x128xf32>
    %c0_11 = arith.constant 0 : index
    %c0_12 = arith.constant 0 : index
    %c0_13 = arith.constant 0 : index
    %16 = vector.load %arg6[%c0_11, %c0_12, %c0_13] : memref<1x1x128xf32, #tpu.memory_space<vmem>>, vector<1x1x128xf32>
    tpu.vector_store %arg6[%c0_11, %c0_12, %c0_13], %15 {strides = array<i32>} : memref<1x1x128xf32, #tpu.memory_space<vmem>>, vector<1x1x128xf32>,
    return
  }
  func.func @transform_0(%arg0: i32) -> (i32, i32) {
    %c0_i32 = arith.constant 0 : i32
    %c0_i32_0 = arith.constant 0 : i32
    return %arg0, %c0_i32 : i32, i32
  }
  func.func @transform_1(%arg0: i32) -> (i32, i32) {
    %c0_i32 = arith.constant 0 : i32
    %c0_i32_0 = arith.constant 0 : i32
    %c0_i32_1 = arith.constant 0 : i32
    return %c0_i32, %c0_i32_0 : i32, i32
  }
  func.func @transform_2(%arg0: i32) -> (i32, i32) {
    %c0_i32 = arith.constant 0 : i32
    %c0_i32_0 = arith.constant 0 : i32
    %c0_i32_1 = arith.constant 0 : i32
    return %c0_i32, %c0_i32_0 : i32, i32
  }
  func.func @transform_3(%arg0: i32) -> (i32, i32) {
    %c0_i32 = arith.constant 0 : i32
    %c0_i32_0 = arith.constant 0 : i32
    %c0_i32_1 = arith.constant 0 : i32
    return %c0_i32, %c0_i32_0 : i32, i32
  }
  func.func @transform_4(%arg0: i32) -> (i32, i32) {
    %c0_i32 = arith.constant 0 : i32
    %c0_i32_0 = arith.constant 0 : i32
    %c0_i32_1 = arith.constant 0 : i32
    return %c0_i32, %c0_i32_0 : i32, i32
  }
  func.func @transform_5(%arg0: i32) -> (i32, i32, i32) {
    %c0_i32 = arith.constant 0 : i32
    %c0_i32_0 = arith.constant 0 : i32
    %c0_i32_1 = arith.constant 0 : i32
    return %arg0, %c0_i32, %c0_i32_0 : i32, i32, i32
  }
}

</mosaic_0001>

<llo_original>
// kernel: tpu_custom_call.1
$region0: #{tpu_custom_call.1}
  #allocation0 [shape = 'u32[]', space=smem, size = 0x4, offset = 0x4, fixed_abs, tag = 'smem constant byte address 0x4 - core index']
  #allocation1 [shape = 'u32[72,128]{1,0:T(1,128)}', space=vmem, size = 0x9000, scoped, tag = 'internal scratch']
  #allocation2 [shape = 'f32[1,1]{1,0:T(1,128)S(6)}', space=smem, size = 0x200, scoped, tag = 'scoped memory for tpu_custom_call.1']
  %s0 = inlined_call_operand.vmem [shape: bf16[128,16], index: 0, kind: input, shape index: {}]
  %s1 = inlined_call_operand.vmem [shape: bf16[16,256], index: 1, kind: input, shape index: {}]
  %s2 = inlined_call_operand.vmem [shape: f32[1,256], index: 2, kind: input, shape index: {}]
  %s3 = inlined_call_operand.vmem [shape: f32[1,256], index: 3, kind: input, shape index: {}]
  %s4 = inlined_call_operand.<no memory space> [shape: f32[1,1], index: 4, kind: input, shape index: {}]
  %s5 = inlined_call_operand.hbm [shape: f32[1,1,128], index: 5, kind: output, shape index: {}]
  %s6 = sld [smem:[#allocation0]]
  $region30: #{tpu_custom_call.1} parent=0
    _
  %s8 = ssub.s32 1, %s6
  %s9 = scalar_select 0, %s8, %s6
  %10 = sst [smem:[#allocation2]] %s4
  $region1: #{tpu_custom_call.1} parent=0
    #allocation3 [shape = 'u8[512]{0}', space=vmem, size = 0x400, scoped, tag = 'output window, operand 0, single buffered']
    #allocation4 [shape = 's32[1]{0}', space=sflag, size = 0x4, scoped, tag = 'scoped memory for tpu_custom_call.1']
    %11 = vsyncpa [#allocation4], 0
    // Predicated region
    $region2: #{tpu_custom_call.1} parent=1 // pred_check
      _
    $region3: #{tpu_custom_call.1} parent=1 // pred_check_branch
      %13 = sbr.rel (0) target = $region5
    $region4: #{tpu_custom_call.1} parent=1 // pred_region
      _
    $region5: #{tpu_custom_call.1} parent=1 // pred_fallthru
      _
    // Predicated region
    $region6: #{tpu_custom_call.1} parent=1 // pred_check
      _
    $region7: #{tpu_custom_call.1} parent=1 // pred_check_branch
      %15 = sbr.rel (0) target = $region9
    $region8: #{tpu_custom_call.1} parent=1 // pred_region
      _
    $region9: #{tpu_custom_call.1} parent=1 // pred_fallthru
      _
    // Predicated region
    $region10: #{tpu_custom_call.1} parent=1 // pred_check
      _
    $region11: #{tpu_custom_call.1} parent=1 // pred_check_branch
      %17 = sbr.rel (0) target = $region13
    $region12: #{tpu_custom_call.1} parent=1 // pred_region
      _
    $region13: #{tpu_custom_call.1} parent=1 // pred_fallthru
      _
    // Predicated region
    $region14: #{tpu_custom_call.1} parent=1 // pred_check
      _
    $region15: #{tpu_custom_call.1} parent=1 // pred_check_branch
      %19 = sbr.rel (0) target = $region17
    $region16: #{tpu_custom_call.1} parent=1 // pred_region
      _
    $region17: #{tpu_custom_call.1} parent=1 // pred_fallthru
      _
    // Predicated region
    $region18: #{tpu_custom_call.1} parent=1 // pred_check
      _
    $region19: #{tpu_custom_call.1} parent=1 // pred_check_branch
      %21 = sbr.rel (0) target = $region21
    $region20: #{tpu_custom_call.1} parent=1 // pred_region
      _
    $region21: #{tpu_custom_call.1} parent=1 // pred_fallthru
      _
    %v23 = vld [vmem:[%s0] sm:$0xf]
    %v24 = vld [vmem:[%s0 + $0x4] sm:$0xf]
    %v25 = vld [vmem:[%s0 + $0x8] sm:$0xf]
    %v26 = vld [vmem:[%s0 + $0xc] sm:$0xf]
    %v27 = vld [vmem:[%s0 + $0x10] sm:$0xf]
    %v28 = vld [vmem:[%s0 + $0x14] sm:$0xf]
    %v29 = vld [vmem:[%s0 + $0x18] sm:$0xf]
    %v30 = vld [vmem:[%s0 + $0x1c] sm:$0xf]
    %v31 = vld [vmem:[%s0 + $0x20] sm:$0xf]
    %v32 = vld [vmem:[%s0 + $0x24] sm:$0xf]
    %v33 = vld [vmem:[%s0 + $0x28] sm:$0xf]
    %v34 = vld [vmem:[%s0 + $0x2c] sm:$0xf]
    %v35 = vld [vmem:[%s0 + $0x30] sm:$0xf]
    %v36 = vld [vmem:[%s0 + $0x34] sm:$0xf]
    %v37 = vld [vmem:[%s0 + $0x38] sm:$0xf]
    %v38 = vld [vmem:[%s0 + $0x3c] sm:$0xf]
    %v39 = vld [vmem:[%s1] sm:$0xff]
    %v40 = vld [vmem:[%s1 + $0x8] sm:$0xff]
    %v41 = vld [vmem:[%s2] sm:$0x3]
    %v43 = vperm.slane %v41, 0
    %v44 = vperm.slane %v41, 1
    %v63 = vunpack.c.l.b16 %v23
    %v64 = vunpack.c.l.b16 %v24
    %v65 = vunpack.c.l.b16 %v25
    %v66 = vunpack.c.l.b16 %v26
    %v67 = vunpack.c.l.b16 %v27
    %v68 = vunpack.c.l.b16 %v28
    %v69 = vunpack.c.l.b16 %v29
    %v70 = vunpack.c.l.b16 %v30
    %v71 = vunpack.c.l.b16 %v31
    %v72 = vunpack.c.l.b16 %v32
    %v73 = vunpack.c.l.b16 %v33
    %v74 = vunpack.c.l.b16 %v34
    %v75 = vunpack.c.l.b16 %v35
    %v76 = vunpack.c.l.b16 %v36
    %v77 = vunpack.c.l.b16 %v37
    %v78 = vunpack.c.l.b16 %v38
    %v79 = vpack.c.b16 %v64, %v63
    %v80 = vpack.c.b16 %v66, %v65
    %v81 = vpack.c.b16 %v68, %v67
    %v82 = vpack.c.b16 %v70, %v69
    %v83 = vpack.c.b16 %v72, %v71
    %v84 = vpack.c.b16 %v74, %v73
    %v85 = vpack.c.b16 %v76, %v75
    %v86 = vpack.c.b16 %v78, %v77
    %v89 = vunpack.c.l.b16 %v39
    %v90 = vunpack.c.h.b16 %v39
    %v91 = vunpack.c.l.b16 %v40
    %v92 = vunpack.c.h.b16 %v40
    %v93 = vpack.c.b16 %v91, %v89
    %v94 = vpack.c.b16 %v92, %v90
    %vm97 = vcmask 130048
    %v99 = vsel %vm97, %v79, 0
    %v102 = vsel %vm97, %v80, 0
    %v105 = vsel %vm97, %v81, 0
    %v108 = vsel %vm97, %v82, 0
    %v111 = vsel %vm97, %v83, 0
    %v114 = vsel %vm97, %v84, 0
    %v117 = vsel %vm97, %v85, 0
    %v120 = vsel %vm97, %v86, 0
    %122 = vmatpush.bf16.msra.mxu0 0
    %123 = vmatpush.bf16.msra.mxu0 0
    %124 = vmatpush.bf16.msra.mxu0 0
    %125 = vmatpush.bf16.msra.mxu0 0
    %126 = vmatpush.bf16.msra.mxu0 0
    %127 = vmatpush.bf16.msra.mxu0 0
    %128 = vmatpush.bf16.msra.mxu0 0
    %129 = vmatpush.bf16.msra.mxu0 %v93
    %130 = vmatmul.bf16.gmra.mxu0 %v99
    %v131 = vpop.f32.mrf.mxu0
    %v132 = vadd.f32 %v43, %v131
    %v133 = vpop.f32.mrf.mxu0
    %v134 = vadd.f32 %v43, %v133
    %135 = vmatmul.bf16.gmra.mxu0 %v102
    %v136 = vpop.f32.mrf.mxu0
    %v137 = vadd.f32 %v43, %v136
    %v138 = vpop.f32.mrf.mxu0
    %v139 = vadd.f32 %v43, %v138
    %140 = vmatmul.bf16.gmra.mxu0 %v105
    %v141 = vpop.f32.mrf.mxu0
    %v142 = vadd.f32 %v43, %v141
    %v143 = vpop.f32.mrf.mxu0
    %v144 = vadd.f32 %v43, %v143
    %145 = vmatmul.bf16.gmra.mxu0 %v108
    %v146 = vpop.f32.mrf.mxu0
    %v147 = vadd.f32 %v43, %v146
    %v148 = vpop.f32.mrf.mxu0
    %v149 = vadd.f32 %v43, %v148
    %150 = vmatmul.bf16.gmra.mxu0 %v111
    %v151 = vpop.f32.mrf.mxu0
    %v152 = vadd.f32 %v43, %v151
    %v153 = vpop.f32.mrf.mxu0
    %v154 = vadd.f32 %v43, %v153
    %155 = vmatmul.bf16.gmra.mxu0 %v114
    %v156 = vpop.f32.mrf.mxu0
    %v157 = vadd.f32 %v43, %v156
    %v158 = vpop.f32.mrf.mxu0
    %v159 = vadd.f32 %v43, %v158
    %160 = vmatmul.bf16.gmra.mxu0 %v117
    %v161 = vpop.f32.mrf.mxu0
    %v162 = vadd.f32 %v43, %v161
    %v163 = vpop.f32.mrf.mxu0
    %v164 = vadd.f32 %v43, %v163
    %165 = vmatmul.bf16.gmra.mxu0 %v120
    %v166 = vpop.f32.mrf.mxu0
    %v167 = vadd.f32 %v43, %v166
    %v168 = vpop.f32.mrf.mxu0
    %v169 = vadd.f32 %v43, %v168
    %170 = vdwg.mxu0
    %171 = vmatpush.bf16.msra.mxu0 0
    %172 = vmatpush.bf16.msra.mxu0 0
    %173 = vmatpush.bf16.msra.mxu0 0
    %174 = vmatpush.bf16.msra.mxu0 0
    %175 = vmatpush.bf16.msra.mxu0 0
    %176 = vmatpush.bf16.msra.mxu0 0
    %177 = vmatpush.bf16.msra.mxu0 0
    %178 = vmatpush.bf16.msra.mxu0 %v94
    %179 = vmatmul.bf16.gmra.mxu0 %v99
    %v180 = vpop.f32.mrf.mxu0
    %v181 = vadd.f32 %v44, %v180
    %v182 = vpop.f32.mrf.mxu0
    %v183 = vadd.f32 %v44, %v182
    %184 = vmatmul.bf16.gmra.mxu0 %v102
    %v185 = vpop.f32.mrf.mxu0
    %v186 = vadd.f32 %v44, %v185
    %v187 = vpop.f32.mrf.mxu0
    %v188 = vadd.f32 %v44, %v187
    %189 = vmatmul.bf16.gmra.mxu0 %v105
    %v190 = vpop.f32.mrf.mxu0
    %v191 = vadd.f32 %v44, %v190
    %v192 = vpop.f32.mrf.mxu0
    %v193 = vadd.f32 %v44, %v192
    %194 = vmatmul.bf16.gmra.mxu0 %v108
    %v195 = vpop.f32.mrf.mxu0
    %v196 = vadd.f32 %v44, %v195
    %v197 = vpop.f32.mrf.mxu0
    %v198 = vadd.f32 %v44, %v197
    %199 = vmatmul.bf16.gmra.mxu0 %v111
    %v200 = vpop.f32.mrf.mxu0
    %v201 = vadd.f32 %v44, %v200
    %v202 = vpop.f32.mrf.mxu0
    %v203 = vadd.f32 %v44, %v202
    %204 = vmatmul.bf16.gmra.mxu0 %v114
    %v205 = vpop.f32.mrf.mxu0
    %v206 = vadd.f32 %v44, %v205
    %v207 = vpop.f32.mrf.mxu0
    %v208 = vadd.f32 %v44, %v207
    %209 = vmatmul.bf16.gmra.mxu0 %v117
    %v210 = vpop.f32.mrf.mxu0
    %v211 = vadd.f32 %v44, %v210
    %v212 = vpop.f32.mrf.mxu0
    %v213 = vadd.f32 %v44, %v212
    %214 = vmatmul.bf16.gmra.mxu0 %v120
    %v215 = vpop.f32.mrf.mxu0
    %v216 = vadd.f32 %v44, %v215
    %v217 = vpop.f32.mrf.mxu0
    %v218 = vadd.f32 %v44, %v217
    %219 = vdwg.mxu0
    %v220 = vmax.f32 %v132, 0.0
    %v221 = vmax.f32 %v181, 0.0
    %v222 = vmax.f32 %v134, 0.0
    %v223 = vmax.f32 %v183, 0.0
    %v224 = vmax.f32 %v137, 0.0
    %v225 = vmax.f32 %v186, 0.0
    %v226 = vmax.f32 %v139, 0.0
    %v227 = vmax.f32 %v188, 0.0
    %v228 = vmax.f32 %v142, 0.0
    %v229 = vmax.f32 %v191, 0.0
    %v230 = vmax.f32 %v144, 0.0
    %v231 = vmax.f32 %v193, 0.0
    %v232 = vmax.f32 %v147, 0.0
    %v233 = vmax.f32 %v196, 0.0
    %v234 = vmax.f32 %v149, 0.0
    %v235 = vmax.f32 %v198, 0.0
    %v236 = vmax.f32 %v152, 0.0
    %v237 = vmax.f32 %v201, 0.0
    %v238 = vmax.f32 %v154, 0.0
    %v239 = vmax.f32 %v203, 0.0
    %v240 = vmax.f32 %v157, 0.0
    %v241 = vmax.f32 %v206, 0.0
    %v242 = vmax.f32 %v159, 0.0
    %v243 = vmax.f32 %v208, 0.0
    %v244 = vmax.f32 %v162, 0.0
    %v245 = vmax.f32 %v211, 0.0
    %v246 = vmax.f32 %v164, 0.0
    %v247 = vmax.f32 %v213, 0.0
    %v248 = vmax.f32 %v167, 0.0
    %v249 = vmax.f32 %v216, 0.0
    %v250 = vmax.f32 %v169, 0.0
    %v251 = vmax.f32 %v218, 0.0
    %v252 = vld [vmem:[%s3] sm:$0x3]
    %v254 = vperm.slane %v252, 0
    %v255 = vperm.slane %v252, 1
    %v258 = vmul.f32 %v220, %v254
    %v259 = vmul.f32 %v221, %v255
    %v260 = vmul.f32 %v222, %v254
    %v261 = vmul.f32 %v223, %v255
    %v262 = vmul.f32 %v224, %v254
    %v263 = vmul.f32 %v225, %v255
    %v264 = vmul.f32 %v226, %v254
    %v265 = vmul.f32 %v227, %v255
    %v266 = vmul.f32 %v228, %v254
    %v267 = vmul.f32 %v229, %v255
    %v268 = vmul.f32 %v230, %v254
    %v269 = vmul.f32 %v231, %v255
    %v270 = vmul.f32 %v232, %v254
    %v271 = vmul.f32 %v233, %v255
    %v272 = vmul.f32 %v234, %v254
    %v273 = vmul.f32 %v235, %v255
    %v274 = vmul.f32 %v236, %v254
    %v275 = vmul.f32 %v237, %v255
    %v276 = vmul.f32 %v238, %v254
    %v277 = vmul.f32 %v239, %v255
    %v278 = vmul.f32 %v240, %v254
    %v279 = vmul.f32 %v241, %v255
    %v280 = vmul.f32 %v242, %v254
    %v281 = vmul.f32 %v243, %v255
    %v282 = vmul.f32 %v244, %v254
    %v283 = vmul.f32 %v245, %v255
    %v284 = vmul.f32 %v246, %v254
    %v285 = vmul.f32 %v247, %v255
    %v286 = vmul.f32 %v248, %v254
    %v287 = vmul.f32 %v249, %v255
    %v288 = vmul.f32 %v250, %v254
    %v289 = vmul.f32 %v251, %v255
    %v290 = vadd.f32 %v258, %v259
    %291 = vadd.xlane.f32.xlu0 %v290
    %v292 = vpop.xlane.xlu0 %291
    %v293 = vadd.f32 %v260, %v261
    %294 = vadd.xlane.f32.xlu0 %v293
    %v295 = vpop.xlane.xlu0 %294
    %v296 = vadd.f32 %v262, %v263
    %297 = vadd.xlane.f32.xlu0 %v296
    %v298 = vpop.xlane.xlu0 %297
    %v299 = vadd.f32 %v264, %v265
    %300 = vadd.xlane.f32.xlu0 %v299
    %v301 = vpop.xlane.xlu0 %300
    %v302 = vadd.f32 %v266, %v267
    %303 = vadd.xlane.f32.xlu0 %v302
    %v304 = vpop.xlane.xlu0 %303
    %v305 = vadd.f32 %v268, %v269
    %306 = vadd.xlane.f32.xlu0 %v305
    %v307 = vpop.xlane.xlu0 %306
    %v308 = vadd.f32 %v270, %v271
    %309 = vadd.xlane.f32.xlu0 %v308
    %v310 = vpop.xlane.xlu0 %309
    %v311 = vadd.f32 %v272, %v273
    %312 = vadd.xlane.f32.xlu0 %v311
    %v313 = vpop.xlane.xlu0 %312
    %v314 = vadd.f32 %v274, %v275
    %315 = vadd.xlane.f32.xlu0 %v314
    %v316 = vpop.xlane.xlu0 %315
    %v317 = vadd.f32 %v276, %v277
    %318 = vadd.xlane.f32.xlu0 %v317
    %v319 = vpop.xlane.xlu0 %318
    %v320 = vadd.f32 %v278, %v279
    %321 = vadd.xlane.f32.xlu0 %v320
    %v322 = vpop.xlane.xlu0 %321
    %v323 = vadd.f32 %v280, %v281
    %324 = vadd.xlane.f32.xlu0 %v323
    %v325 = vpop.xlane.xlu0 %324
    %v326 = vadd.f32 %v282, %v283
    %327 = vadd.xlane.f32.xlu0 %v326
    %v328 = vpop.xlane.xlu0 %327
    %v329 = vadd.f32 %v284, %v285
    %330 = vadd.xlane.f32.xlu0 %v329
    %v331 = vpop.xlane.xlu0 %330
    %v332 = vadd.f32 %v286, %v287
    %333 = vadd.xlane.f32.xlu0 %v332
    %v334 = vpop.xlane.xlu0 %333
    %v335 = vadd.f32 %v288, %v289
    %336 = vadd.xlane.f32.xlu0 %v335
    %v337 = vpop.xlane.xlu0 %336
    %s338 = sld [smem:[#allocation2]]
    %v339 = vstv %s338
    %v340 = vadd.f32 %v292, %v339
    %v341 = vadd.f32 %v295, %v339
    %v342 = vadd.f32 %v298, %v339
    %v343 = vadd.f32 %v301, %v339
    %v344 = vadd.f32 %v304, %v339
    %v345 = vadd.f32 %v307, %v339
    %v346 = vadd.f32 %v310, %v339
    %v347 = vadd.f32 %v313, %v339
    %v348 = vadd.f32 %v316, %v339
    %v349 = vadd.f32 %v319, %v339
    %v350 = vadd.f32 %v322, %v339
    %v351 = vadd.f32 %v325, %v339
    %v352 = vadd.f32 %v328, %v339
    %v353 = vadd.f32 %v331, %v339
    %v354 = vadd.f32 %v334, %v339
    %v355 = vadd.f32 %v337, %v339
    %v372 = vlaneseq
    %v373 = vand.u32 %v372, 127
    %v374 = vperm.slane %v340, %v373
    %v375 = vadd.s32 %v373, 4294967288
    %v376 = vperm.slane %v341, %v375
    %vm377 = vcmask 130112
    %v378 = vsel %vm377, %v376, %v374
    %v379 = vadd.s32 %v373, 4294967280
    %v380 = vperm.slane %v342, %v379
    %vm381 = vcmask 195712
    %v382 = vsel %vm381, %v380, %v378
    %v383 = vadd.s32 %v373, 4294967272
    %v384 = vperm.slane %v343, %v383
    %vm385 = vcmask 261312
    %v386 = vsel %vm385, %v384, %v382
    %v387 = vadd.s32 %v373, 4294967264
    %v388 = vperm.slane %v344, %v387
    %vm389 = vcmask 326912
    %v390 = vsel %vm389, %v388, %v386
    %v391 = vadd.s32 %v373, 4294967256
    %v392 = vperm.slane %v345, %v391
    %vm393 = vcmask 392512
    %v394 = vsel %vm393, %v392, %v390
    %v395 = vadd.s32 %v373, 4294967248
    %v396 = vperm.slane %v346, %v395
    %vm397 = vcmask 458112
    %v398 = vsel %vm397, %v396, %v394
    %v399 = vadd.s32 %v373, 4294967240
    %v400 = vperm.slane %v347, %v399
    %vm401 = vcmask 523712
    %v402 = vsel %vm401, %v400, %v398
    %v403 = vadd.s32 %v373, 4294967232
    %v404 = vperm.slane %v348, %v403
    %vm405 = vcmask 589312
    %v406 = vsel %vm405, %v404, %v402
    %v407 = vadd.s32 %v373, 4294967224
    %v408 = vperm.slane %v349, %v407
    %vm409 = vcmask 654912
    %v410 = vsel %vm409, %v408, %v406
    %v411 = vadd.s32 %v373, 4294967216
    %v412 = vperm.slane %v350, %v411
    %vm413 = vcmask 720512
    %v414 = vsel %vm413, %v412, %v410
    %v415 = vadd.s32 %v373, 4294967208
    %v416 = vperm.slane %v351, %v415
    %vm417 = vcmask 786112
    %v418 = vsel %vm417, %v416, %v414
    %v419 = vadd.s32 %v373, 4294967200
    %v420 = vperm.slane %v352, %v419
    %vm421 = vcmask 851712
    %v422 = vsel %vm421, %v420, %v418
    %v423 = vadd.s32 %v373, 4294967192
    %v424 = vperm.slane %v353, %v423
    %vm425 = vcmask 917312
    %v426 = vsel %vm425, %v424, %v422
    %v427 = vadd.s32 %v373, 4294967184
    %v428 = vperm.slane %v354, %v427
    %vm429 = vcmask 982912
    %v430 = vsel %vm429, %v428, %v426
    %v431 = vadd.s32 %v373, 4294967176
    %v432 = vperm.slane %v355, %v431
    %vm433 = vcmask 1048512
    %v434 = vsel %vm433, %v432, %v430
    %436 = vst [vmem:[#allocation3] sm:$0x1] %v434
    // Predicated region
    $region22: #{tpu_custom_call.1} parent=1 // pred_check
      _
    $region23: #{tpu_custom_call.1} parent=1 // pred_check_branch
      %438 = sbr.rel (0) target = $region25
    $region24: #{tpu_custom_call.1} parent=1 // pred_region
      %440 = vsyncadd [#allocation4], 0
      %s442 = sshll.u32 [#allocation3], 4
      %s443 = int_to_ptr.vmem [resolvable:$true] %s442
      %s444 = sshll.u32 %s5, 4
      %s445 = int_to_ptr.hbm [resolvable:$true] %s444
      %447 = dma.vmem_to_hbm [thread:$0]  %s443, 16, %s445, [#allocation4]
    $region25: #{tpu_custom_call.1} parent=1 // pred_fallthru
      _
    // Predicated region
    $region26: #{tpu_custom_call.1} parent=1 // pred_check
      _
    $region27: #{tpu_custom_call.1} parent=1 // pred_check_branch
      %449 = sbr.rel (0) target = $region29
    $region28: #{tpu_custom_call.1} parent=1 // pred_region
      %451 = dma.done [#allocation4], 16
    $region29: #{tpu_custom_call.1} parent=1 // pred_fallthru
      _
    %452 = vsyncpa [#allocation4], 1

</llo_original>
